<compile_context>
chip_gen: v7x
topology: tpu7x:2x2x1
jax: 0.10.0
libtpu: 0.0.40
codegen_flags: <defaults>
</compile_context>

<pallas_src>
import functools
import math

import jax
import jax.numpy as jnp
from jax import lax
from jax.experimental import pallas as pl
from jax.experimental.pallas import tpu as pltpu

LOG_STD_MIN = -10.0
LOG_STD_MAX = 2.0
LANE = 128  # TPU lane width


def _round_up(n, m):
    return ((n + m - 1) // m) * m


def actor_kernel(x_ref, noise_ref, w_ref, b_ref, out_ref, *,
                 action_dim, k_pad, log_std_min, log_std_max):
    w_dtype = w_ref.dtype          # bf16 (default) or f32
    x = x_ref[...]                 # [B, K_pad] f32, zero-padded beyond obs_dim
    noise = noise_ref[...]         # [B, 128] f32, zero-padded beyond action_dim

    # ---- MLP: Linear -> ReLU -> Linear -> ReLU -> fused head (MXU) ----
    # Weight slab layout (lane-128 aligned columns): [w1 | w2 | w3_mu | w3_ls].
    h = jnp.dot(x.astype(w_dtype), w_ref[:, 0:LANE],
                preferred_element_type=jnp.float32) + b_ref[:, 0:LANE]
    h = jnp.maximum(h, 0.0)
    # Only the first k_pad lanes of h carry data (hidden <= k_pad); contracting
    # just those keeps the weight slab at K_pad rows.
    h = jnp.dot(h[:, :k_pad].astype(w_dtype), w_ref[:, LANE:2 * LANE],
                preferred_element_type=jnp.float32) + b_ref[:, LANE:2 * LANE]
    h = jnp.maximum(h, 0.0)
    # Fused head: one [B, 256] dot; chunk(2, dim=-1) == lane-128 aligned split.
    head = jnp.dot(h[:, :k_pad].astype(w_dtype), w_ref[:, 2 * LANE:4 * LANE],
                   preferred_element_type=jnp.float32) + b_ref[:, 2 * LANE:4 * LANE]
    mu = head[:, 0:LANE]
    log_std = head[:, LANE:2 * LANE]

    # ---- log_std squashing into [log_std_min, log_std_max] ----
    log_std = jnp.tanh(log_std)
    log_std = log_std_min + 0.5 * (log_std_max - log_std_min) * (log_std + 1.0)

    # ---- reparameterized sample (compute_pi=True) ----
    std = jnp.exp(log_std)
    pi = mu + noise * std

    # Only the first `action_dim` lanes are real; exclude padded lanes from the
    # reductions (log_std is non-zero there after the squash).
    lane_id = lax.broadcasted_iota(jnp.int32, mu.shape, 1)
    valid = lane_id < action_dim

    # ---- gaussian_logprob(noise, log_std) (compute_log_pi=True) ----
    residual = jnp.sum(jnp.where(valid, -0.5 * noise * noise - log_std, 0.0),
                       axis=-1, keepdims=True)
    log_pi = residual - 0.5 * math.log(2.0 * math.pi) * action_dim

    # ---- squash(mu, pi, log_pi) ----
    mu_sq = jnp.tanh(mu)
    pi_sq = jnp.tanh(pi)
    corr = jnp.log(jnp.maximum(1.0 - pi_sq * pi_sq, 0.0) + 1e-6)
    log_pi = log_pi - jnp.sum(jnp.where(valid, corr, 0.0),
                              axis=-1, keepdims=True)

    # ---- lane-dense output slab (unmasked 128-lane stores) ----
    # Block 2 carries log_std in its first action_dim lanes and log_pi
    # (broadcast) in the padded tail lanes -> saves a 4th 128-lane store.
    out_ref[:, 0:LANE] = mu_sq
    out_ref[:, LANE:2 * LANE] = pi_sq
    out_ref[:, 2 * LANE:3 * LANE] = jnp.where(valid, log_std, log_pi)


def pack_actor_params(params, *, action_dim, weight_dtype=jnp.bfloat16):
    """Pack (w1,b1,w2,b2,w3,b3) ONCE into a weight slab and a bias slab.

    Weight slab: weight_dtype[K_pad, 4*128] = [w1 | w2 | w3_mu | w3_logstd],
    K_pad = round_up(max(obs_dim, hidden), 16). Bias slab: f32[1, 4*128].
    Call this at init and reuse the slabs on every forward.
    """
    w1, b1, w2, b2, w3, b3 = params
    obs_dim, hidden = w1.shape
    assert w2.shape == (hidden, hidden)
    assert w3.shape[0] == hidden and w3.shape[1] == 2 * action_dim
    assert obs_dim <= LANE and hidden <= LANE and action_dim < LANE, \
        "dims > 128 need a tiled (grid) variant"  # TODO(synk): tile for big dims

    k_pad = _round_up(max(obs_dim, hidden), 16)   # bf16-friendly sublane count
    b1 = jnp.reshape(b1, (1, -1)).astype(jnp.float32)
    b2 = jnp.reshape(b2, (1, -1)).astype(jnp.float32)
    b3 = jnp.reshape(b3, (1, -1)).astype(jnp.float32)

    w_slab = jnp.zeros((k_pad, 4 * LANE), jnp.float32)
    w_slab = w_slab.at[:obs_dim, 0:hidden].set(w1.astype(jnp.float32))
    w_slab = w_slab.at[:hidden, LANE:LANE + hidden].set(w2.astype(jnp.float32))
    w_slab = w_slab.at[:hidden, 2 * LANE:2 * LANE + action_dim].set(
        w3[:, :action_dim].astype(jnp.float32))
    w_slab = w_slab.at[:hidden, 3 * LANE:3 * LANE + action_dim].set(
        w3[:, action_dim:].astype(jnp.float32))
    w_slab = w_slab.astype(weight_dtype)

    b_slab = jnp.zeros((1, 4 * LANE), jnp.float32)
    b_slab = b_slab.at[:, 0:hidden].set(b1)
    b_slab = b_slab.at[:, LANE:LANE + hidden].set(b2)
    b_slab = b_slab.at[:, 2 * LANE:2 * LANE + action_dim].set(b3[:, :action_dim])
    b_slab = b_slab.at[:, 3 * LANE:3 * LANE + action_dim].set(b3[:, action_dim:])
    return w_slab, b_slab


def actor_forward(x, noise, w_slab, b_slab, *, action_dim,
                  log_std_min=LOG_STD_MIN, log_std_max=LOG_STD_MAX):
    """Actor forward pass (compute_pi=True, compute_log_pi=True).

    Expects pre-packed slabs from pack_actor_params (packing is hoisted out of
    the per-call path). x: [B, obs_dim]; noise: [B, action_dim].
    """
    B, obs_dim = x.shape
    k_pad = w_slab.shape[0]
    assert w_slab.shape == (k_pad, 4 * LANE) and b_slab.shape == (1, 4 * LANE)
    assert obs_dim <= k_pad and action_dim < LANE
    assert noise.shape == (B, action_dim)

    x = x.astype(jnp.float32)
    if obs_dim < k_pad:
        x = jnp.pad(x, ((0, 0), (0, k_pad - obs_dim)))
    noise = jnp.pad(noise.astype(jnp.float32),
                    ((0, 0), (0, LANE - action_dim)))

    kernel = functools.partial(actor_kernel, action_dim=action_dim, k_pad=k_pad,
                               log_std_min=log_std_min,
                               log_std_max=log_std_max)

    flops = 2 * B * k_pad * 4 * LANE                 # 3 matmuls (head fused)
    transcendentals = 5 * B * LANE                   # tanh x3, exp, log @ 128 lanes
    bytes_accessed = (x.size * 4 + noise.size * 4
                      + w_slab.size * w_slab.dtype.itemsize
                      + b_slab.size * 4 + B * 3 * LANE * 4)
    cost = pl.CostEstimate(flops=int(flops),
                           transcendentals=int(transcendentals),
                           bytes_accessed=int(bytes_accessed))

    # Problem is tiny: whole arrays resident in VMEM, single invocation, no grid.
    out = pl.pallas_call(
        kernel,
        out_shape=jax.ShapeDtypeStruct((B, 3 * LANE), jnp.float32),
        in_specs=[pl.BlockSpec(memory_space=pltpu.MemorySpace.VMEM)] * 4,
        out_specs=pl.BlockSpec(memory_space=pltpu.MemorySpace.VMEM),
        cost_estimate=cost,
    )(x, noise, w_slab, b_slab)

    mu = out[:, 0 * LANE:0 * LANE + action_dim]
    pi = out[:, 1 * LANE:1 * LANE + action_dim]
    log_std = out[:, 2 * LANE:2 * LANE + action_dim]
    log_pi = out[:, 2 * LANE + action_dim:2 * LANE + action_dim + 1]
    return mu, pi, log_pi, log_std


def _reference(x, params, noise, *, action_dim,
               log_std_min=LOG_STD_MIN, log_std_max=LOG_STD_MAX,
               weight_dtype=jnp.float32):
    """Pure-JAX reference. weight_dtype=bf16 mirrors the kernel's matmul casts."""
    w1, b1, w2, b2, w3, b3 = params

    def lin(a, w, b):
        return (jnp.dot(a.astype(weight_dtype), w.astype(weight_dtype),
                        preferred_element_type=jnp.float32)
                + jnp.reshape(b, (1, -1)).astype(jnp.float32))

    h = jnp.maximum(lin(x, w1, b1), 0.0)
    h = jnp.maximum(lin(h, w2, b2), 0.0)
    out = lin(h, w3, b3)
    mu, log_std = out[:, :action_dim], out[:, action_dim:]
    log_std = jnp.tanh(log_std)
    log_std = log_std_min + 0.5 * (log_std_max - log_std_min) * (log_std + 1.0)
    std = jnp.exp(log_std)
    pi = mu + noise * std
    residual = jnp.sum(-0.5 * noise ** 2 - log_std, axis=-1, keepdims=True)
    log_pi = residual - 0.5 * math.log(2.0 * math.pi) * action_dim
    mu_sq, pi_sq = jnp.tanh(mu), jnp.tanh(pi)
    log_pi = log_pi - jnp.sum(
        jnp.log(jnp.maximum(1.0 - pi_sq ** 2, 0.0) + 1e-6),
        axis=-1, keepdims=True)
    return mu_sq, pi_sq, log_pi, log_std


if __name__ == "__main__":
    B = 8          # batch
    OBS_DIM = 32   # obs_dim (encoder is None)
    HIDDEN = 32    # hidden_dim
    ACTION = 4     # action_dim -> MLP output is 2*action_dim = 8

    key = jax.random.PRNGKey(0)
    k_x, k_n, k1, k2, k3 = jax.random.split(key, 5)

    x = jax.random.normal(k_x, (B, OBS_DIM), dtype=jnp.float32)
    # torch.randn_like(mu) is random; here the sampling noise is a
    # deterministic standard-normal draw passed into the kernel.
    noise = jax.random.normal(k_n, (B, ACTION), dtype=jnp.float32)

    def linear_params(k, fan_in, fan_out):
        w = jax.random.normal(k, (fan_in, fan_out), dtype=jnp.float32)
        w = w * (1.0 / jnp.sqrt(jnp.float32(fan_in)))
        b = jnp.zeros((1, fan_out), dtype=jnp.float32)
        return w, b

    w1, b1 = linear_params(k1, OBS_DIM, HIDDEN)
    w2, b2 = linear_params(k2, HIDDEN, HIDDEN)
    w3, b3 = linear_params(k3, HIDDEN, 2 * ACTION)
    params = (w1, b1, w2, b2, w3, b3)

    fwd = jax.jit(functools.partial(actor_forward, action_dim=ACTION))

    # --- f32 weight slab: exact-math path, checked tightly vs f32 reference ---
    w_f32, b_f32 = pack_actor_params(params, action_dim=ACTION,
                                     weight_dtype=jnp.float32)
    out_f32 = fwd(x, noise, w_f32, b_f32)
    jax.block_until_ready(out_f32)
    ref_f32 = _reference(x, params, noise, action_dim=ACTION)
    for got, want in zip(out_f32, ref_f32):
        assert got.shape == want.shape and got.dtype == want.dtype
        assert jnp.allclose(got, want, rtol=1e-3, atol=1e-3), \
            "f32 path mismatch vs reference"

    # --- bf16 weight slab (default, halves weight DMA): checked vs a reference
    # that mirrors the same bf16 matmul-input casts (isolates kernel logic from
    # the intentional bf16 quantization noise). ---
    w_bf16, b_bf16 = pack_actor_params(params, action_dim=ACTION)  # bf16 default
    out_bf16 = fwd(x, noise, w_bf16, b_bf16)
    jax.block_until_ready(out_bf16)
    ref_bf16 = _reference(x, params, noise, action_dim=ACTION,
                          weight_dtype=jnp.bfloat16)
    for got, want in zip(out_bf16, ref_bf16):
        assert got.shape == want.shape and got.dtype == want.dtype
        assert jnp.allclose(got, want, rtol=2e-2, atol=2e-2), \
            "bf16 path mismatch vs bf16-mirror reference"

    print("KERNEL_OK")
</pallas_src>

<mosaic_0001>
module attributes {stable_mosaic.version = 11 : i64} {
  func.func @actor_kernel(%arg0: memref<8x32xf32, #tpu.memory_space<vmem>>, %arg1: memref<8x128xf32, #tpu.memory_space<vmem>>, %arg2: memref<32x512xf32, #tpu.memory_space<vmem>>, %arg3: memref<1x512xf32, #tpu.memory_space<vmem>>, %arg4: memref<8x384xf32, #tpu.memory_space<vmem>>) attributes {dimension_semantics = [], scalar_prefetch = 0 : i64, scratch_operands = 0 : i64, tpu.core_type = #tpu.core_type<tc>} {
    %c0 = arith.constant 0 : index
    %c0_0 = arith.constant 0 : index
    %0 = vector.load %arg0[%c0, %c0_0] : memref<8x32xf32, #tpu.memory_space<vmem>>, vector<8x32xf32>
    %c0_1 = arith.constant 0 : index
    %c0_2 = arith.constant 0 : index
    %1 = vector.load %arg1[%c0_1, %c0_2] : memref<8x128xf32, #tpu.memory_space<vmem>>, vector<8x128xf32>
    %c0_3 = arith.constant 0 : index
    %c0_4 = arith.constant 0 : index
    %2 = vector.load %arg2[%c0_3, %c0_4] : memref<32x512xf32, #tpu.memory_space<vmem>>, vector<32x128xf32>
    %cst = arith.constant dense<0.000000e+00> : vector<8x128xf32>
    %3 = tpu.matmul %0, %2, %cst {dimension_numbers = #tpu.dot_dimension_numbers<[1], [0], [0], [1], [0, 0, 1, 1], [], []>} : vector<8x32xf32>, vector<32x128xf32>, vector<8x128xf32> -> vector<8x128xf32>
    %c0_5 = arith.constant 0 : index
    %c0_6 = arith.constant 0 : index
    %4 = vector.load %arg3[%c0_5, %c0_6] : memref<1x512xf32, #tpu.memory_space<vmem>>, vector<1x128xf32>
    %5 = vector.broadcast %4 : vector<1x128xf32> to vector<8x128xf32>
    %6 = arith.addf %3, %5 : vector<8x128xf32>
    %cst_7 = arith.constant 0.000000e+00 : f32
    %7 = vector.broadcast %cst_7 : f32 to vector<8x128xf32>
    %8 = arith.maximumf %6, %7 : vector<8x128xf32>
    %9 = vector.extract_strided_slice %8 {offsets = [0, 0], sizes = [8, 32], strides = [1, 1]} : vector<8x128xf32> to vector<8x32xf32>
    %c0_8 = arith.constant 0 : index
    %c128 = arith.constant 128 : index
    %10 = vector.load %arg2[%c0_8, %c128] : memref<32x512xf32, #tpu.memory_space<vmem>>, vector<32x128xf32>
    %cst_9 = arith.constant dense<0.000000e+00> : vector<8x128xf32>
    %11 = tpu.matmul %9, %10, %cst_9 {dimension_numbers = #tpu.dot_dimension_numbers<[1], [0], [0], [1], [0, 0, 1, 1], [], []>} : vector<8x32xf32>, vector<32x128xf32>, vector<8x128xf32> -> vector<8x128xf32>
    %c0_10 = arith.constant 0 : index
    %c128_11 = arith.constant 128 : index
    %12 = vector.load %arg3[%c0_10, %c128_11] : memref<1x512xf32, #tpu.memory_space<vmem>>, vector<1x128xf32>
    %13 = vector.broadcast %12 : vector<1x128xf32> to vector<8x128xf32>
    %14 = arith.addf %11, %13 : vector<8x128xf32>
    %cst_12 = arith.constant 0.000000e+00 : f32
    %15 = vector.broadcast %cst_12 : f32 to vector<8x128xf32>
    %16 = arith.maximumf %14, %15 : vector<8x128xf32>
    %17 = vector.extract_strided_slice %16 {offsets = [0, 0], sizes = [8, 32], strides = [1, 1]} : vector<8x128xf32> to vector<8x32xf32>
    %c0_13 = arith.constant 0 : index
    %c256 = arith.constant 256 : index
    %18 = vector.load %arg2[%c0_13, %c256] : memref<32x512xf32, #tpu.memory_space<vmem>>, vector<32x256xf32>
    %cst_14 = arith.constant dense<0.000000e+00> : vector<8x256xf32>
    %19 = tpu.matmul %17, %18, %cst_14 {dimension_numbers = #tpu.dot_dimension_numbers<[1], [0], [0], [1], [0, 0, 1, 1], [], []>} : vector<8x32xf32>, vector<32x256xf32>, vector<8x256xf32> -> vector<8x256xf32>
    %c0_15 = arith.constant 0 : index
    %c256_16 = arith.constant 256 : index
    %20 = vector.load %arg3[%c0_15, %c256_16] : memref<1x512xf32, #tpu.memory_space<vmem>>, vector<1x256xf32>
    %21 = vector.broadcast %20 : vector<1x256xf32> to vector<8x256xf32>
    %22 = arith.addf %19, %21 : vector<8x256xf32>
    %23 = vector.extract_strided_slice %22 {offsets = [0, 0], sizes = [8, 128], strides = [1, 1]} : vector<8x256xf32> to vector<8x128xf32>
    %24 = vector.extract_strided_slice %22 {offsets = [0, 128], sizes = [8, 128], strides = [1, 1]} : vector<8x256xf32> to vector<8x128xf32>
    %25 = math.tanh %24 : vector<8x128xf32>
    %cst_17 = arith.constant 1.000000e+00 : f32
    %26 = vector.broadcast %cst_17 : f32 to vector<8x128xf32>
    %27 = arith.addf %25, %26 : vector<8x128xf32>
    %cst_18 = arith.constant 6.000000e+00 : f32
    %28 = vector.broadcast %cst_18 : f32 to vector<8x128xf32>
    %29 = arith.mulf %28, %27 : vector<8x128xf32>
    %cst_19 = arith.constant -1.000000e+01 : f32
    %30 = vector.broadcast %cst_19 : f32 to vector<8x128xf32>
    %31 = arith.addf %30, %29 : vector<8x128xf32>
    %32 = math.exp %31 : vector<8x128xf32>
    %33 = arith.mulf %1, %32 : vector<8x128xf32>
    %34 = arith.addf %23, %33 : vector<8x128xf32>
    %35 = tpu.iota {dimensions = array<i32: 1>} : vector<8x128xi32>
    %c4_i32 = arith.constant 4 : i32
    %36 = vector.broadcast %c4_i32 : i32 to vector<8x128xi32>
    %37 = arith.cmpi slt, %35, %36 : vector<8x128xi32>
    %cst_20 = arith.constant -5.000000e-01 : f32
    %38 = vector.broadcast %cst_20 : f32 to vector<8x128xf32>
    %39 = arith.mulf %38, %1 : vector<8x128xf32>
    %40 = arith.mulf %39, %1 : vector<8x128xf32>
    %41 = arith.subf %40, %31 : vector<8x128xf32>
    %cst_21 = arith.constant 0.000000e+00 : f32
    %42 = vector.broadcast %cst_21 : f32 to vector<8x128xf32>
    %43 = arith.select %37, %41, %42 : vector<8x128xi1>, vector<8x128xf32>
    %cst_22 = arith.constant dense<0.000000e+00> : vector<8xf32>
    %44 = vector.multi_reduction <add>, %43, %cst_22 [1] : vector<8x128xf32> to vector<8xf32>
    %45 = vector.shape_cast %44 : vector<8xf32> to vector<8x1xf32>
    %cst_23 = arith.constant 3.67575407 : f32
    %46 = vector.broadcast %cst_23 : f32 to vector<8x1xf32>
    %47 = arith.subf %45, %46 : vector<8x1xf32>
    %48 = math.tanh %23 : vector<8x128xf32>
    %49 = math.tanh %34 : vector<8x128xf32>
    %50 = arith.mulf %49, %49 : vector<8x128xf32>
    %cst_24 = arith.constant 1.000000e+00 : f32
    %51 = vector.broadcast %cst_24 : f32 to vector<8x128xf32>
    %52 = arith.subf %51, %50 : vector<8x128xf32>
    %cst_25 = arith.constant 0.000000e+00 : f32
    %53 = vector.broadcast %cst_25 : f32 to vector<8x128xf32>
    %54 = arith.maximumf %52, %53 : vector<8x128xf32>
    %cst_26 = arith.constant 9.99999997E-7 : f32
    %55 = vector.broadcast %cst_26 : f32 to vector<8x128xf32>
    %56 = arith.addf %54, %55 : vector<8x128xf32>
    %57 = math.log %56 : vector<8x128xf32>
    %cst_27 = arith.constant 0.000000e+00 : f32
    %58 = vector.broadcast %cst_27 : f32 to vector<8x128xf32>
    %59 = arith.select %37, %57, %58 : vector<8x128xi1>, vector<8x128xf32>
    %cst_28 = arith.constant dense<0.000000e+00> : vector<8xf32>
    %60 = vector.multi_reduction <add>, %59, %cst_28 [1] : vector<8x128xf32> to vector<8xf32>
    %61 = vector.shape_cast %60 : vector<8xf32> to vector<8x1xf32>
    %62 = arith.subf %47, %61 : vector<8x1xf32>
    %c0_29 = arith.constant 0 : index
    %c0_30 = arith.constant 0 : index
    %63 = vector.load %arg4[%c0_29, %c0_30] : memref<8x384xf32, #tpu.memory_space<vmem>>, vector<8x128xf32>
    tpu.vector_store %arg4[%c0_29, %c0_30], %48 {strides = array<i32>} : memref<8x384xf32, #tpu.memory_space<vmem>>, vector<8x128xf32>,
    %c0_31 = arith.constant 0 : index
    %c128_32 = arith.constant 128 : index
    %64 = vector.load %arg4[%c0_31, %c128_32] : memref<8x384xf32, #tpu.memory_space<vmem>>, vector<8x128xf32>
    tpu.vector_store %arg4[%c0_31, %c128_32], %49 {strides = array<i32>} : memref<8x384xf32, #tpu.memory_space<vmem>>, vector<8x128xf32>,
    %65 = vector.shape_cast %62 : vector<8x1xf32> to vector<8x1xf32>
    %66 = vector.broadcast %65 : vector<8x1xf32> to vector<8x128xf32>
    %67 = arith.select %37, %31, %66 : vector<8x128xi1>, vector<8x128xf32>
    %c0_33 = arith.constant 0 : index
    %c256_34 = arith.constant 256 : index
    %68 = vector.load %arg4[%c0_33, %c256_34] : memref<8x384xf32, #tpu.memory_space<vmem>>, vector<8x128xf32>
    tpu.vector_store %arg4[%c0_33, %c256_34], %67 {strides = array<i32>} : memref<8x384xf32, #tpu.memory_space<vmem>>, vector<8x128xf32>,
    return
  }
}

</mosaic_0001>

<llo_original>
// kernel: actor_forward.1
$region0: #{actor_forward.1}
  #allocation0 [shape = 'u32[]', space=smem, size = 0x4, offset = 0x4, fixed_abs, tag = 'smem constant byte address 0x4 - core index']
  #allocation1 [shape = 'u32[144,128]{1,0:T(1,128)}', space=vmem, size = 0x12000, scoped, tag = 'internal scratch']
  %s0 = inlined_call_operand.vmem [shape: f32[8,32], index: 0, kind: input, shape index: {}]
  %s1 = inlined_call_operand.vmem [shape: f32[8,128], index: 1, kind: input, shape index: {}]
  %s2 = inlined_call_operand.hbm [shape: f32[32,512], index: 2, kind: input, shape index: {}]
  %s3 = inlined_call_operand.vmem [shape: f32[1,512], index: 3, kind: input, shape index: {}]
  %s4 = inlined_call_operand.vmem [shape: f32[8,384], index: 4, kind: output, shape index: {}]
  %s5 = sld [smem:[#allocation0]]
  $region30: #{actor_forward.1} parent=0
    _
  %s7 = ssub.s32 1, %s5
  %s8 = scalar_select 0, %s7, %s5
  $region1: #{actor_forward.1} parent=0
    #allocation2 [shape = 'u8[65536]{0}', space=vmem, size = 0x10000, scoped, tag = 'input window, operand 2, single buffered']
    #allocation3 [shape = 's32[1]{0}', space=sflag, size = 0x4, scoped, tag = 'scoped memory for actor_forward.1']
    %9 = vsyncpa [#allocation3], 0
    // Predicated region
    $region2: #{actor_forward.1} parent=1 // pred_check
      _
    $region3: #{actor_forward.1} parent=1 // pred_check_branch
      %11 = sbr.rel (0) target = $region5
    $region4: #{actor_forward.1} parent=1 // pred_region
      _
    $region5: #{actor_forward.1} parent=1 // pred_fallthru
      _
    // Predicated region
    $region6: #{actor_forward.1} parent=1 // pred_check
      _
    $region7: #{actor_forward.1} parent=1 // pred_check_branch
      %13 = sbr.rel (0) target = $region9
    $region8: #{actor_forward.1} parent=1 // pred_region
      _
    $region9: #{actor_forward.1} parent=1 // pred_fallthru
      _
    // Predicated region
    $region10: #{actor_forward.1} parent=1 // pred_check
      _
    $region11: #{actor_forward.1} parent=1 // pred_check_branch
      %15 = sbr.rel (0) target = $region13
    $region12: #{actor_forward.1} parent=1 // pred_region
      %s17 = ssub.s32 2048, 2048
      %18 = vsyncadd [#allocation3], %s17
      %s19 = sshll.u32 [#allocation2], 4
      %s20 = int_to_ptr.vmem [resolvable:$true] %s19
      %25 = dma.hbm_to_vmem [thread:$0]  %s2, 2048, %s20, [#allocation3], 512, 512, 32
    $region13: #{actor_forward.1} parent=1 // pred_fallthru
      _
    // Predicated region
    $region14: #{actor_forward.1} parent=1 // pred_check
      _
    $region15: #{actor_forward.1} parent=1 // pred_check_branch
      %27 = sbr.rel (0) target = $region17
    $region16: #{actor_forward.1} parent=1 // pred_region
      _
    $region17: #{actor_forward.1} parent=1 // pred_fallthru
      _
    // Predicated region
    $region18: #{actor_forward.1} parent=1 // pred_check
      _
    $region19: #{actor_forward.1} parent=1 // pred_check_branch
      %29 = sbr.rel (0) target = $region21
    $region20: #{actor_forward.1} parent=1 // pred_region
      %30 = dma.done [#allocation3], 2048
    $region21: #{actor_forward.1} parent=1 // pred_fallthru
      _
    %v31 = vld [vmem:[%s0] sm:$0xff]
    %v32 = vld [vmem:[%s1] sm:$0xff]
    %v33 = vld [vmem:[#allocation2] sm:$0xff]
    %v34 = vld [vmem:[#allocation2 + $0x20] sm:$0xff]
    %v35 = vld [vmem:[#allocation2 + $0x40] sm:$0xff]
    %v36 = vld [vmem:[#allocation2 + $0x60] sm:$0xff]
    %v37 = vld [vmem:[%s3] sm:$0x1]
    %v39 = vlaneseq
    %v40 = vshrl.u32 %v39, 7
    %v41 = vsub.s32 0, %v40
    %v42 = vrot.slane %v37, %v41
    %vm44 = vcmask 261120
    %v46 = vsel %vm44, %v31, 0
    %48 = vmatprep.subr.mxu0 0.0
    %49 = vmatpush1.msra.mxu0 %v33
    %50 = vmatprep.subr.mxu0 0.0
    %51 = vmatpush1.msra.mxu0 %v34
    %52 = vmatprep.subr.mxu0 0.0
    %53 = vmatpush1.msra.mxu0 %v35
    %54 = vmatprep.subr.mxu0 0.0
    %55 = vmatpush1.msra.mxu0 %v36
    %56 = vmatprep.subr.mxu0 0.0
    %57 = vmatpush1.msra.mxu0 0.0
    %58 = vmatprep.subr.mxu0 0.0
    %59 = vmatpush1.msra.mxu0 0.0
    %60 = vmatprep.subr.mxu0 0.0
    %61 = vmatpush1.msra.mxu0 0.0
    %62 = vmatprep.subr.mxu0 0.0
    %63 = vmatpush1.msra.mxu0 0.0
    %64 = vmatprep.subr.mxu0 0.0
    %65 = vmatpush1.msra.mxu0 0.0
    %66 = vmatprep.subr.mxu0 0.0
    %67 = vmatpush1.msra.mxu0 0.0
    %68 = vmatprep.subr.mxu0 0.0
    %69 = vmatpush1.msra.mxu0 0.0
    %70 = vmatprep.subr.mxu0 0.0
    %71 = vmatpush1.msra.mxu0 0.0
    %72 = vmatprep.subr.mxu0 0.0
    %73 = vmatpush1.msra.mxu0 0.0
    %74 = vmatprep.subr.mxu0 0.0
    %75 = vmatpush1.msra.mxu0 0.0
    %76 = vmatprep.subr.mxu0 0.0
    %77 = vmatpush1.msra.mxu0 0.0
    %78 = vmatprep.subr.mxu0 0.0
    %79 = vmatpush1.msra.mxu0 0.0
    %80 = vmatprep.subr.mxu0 0.0
    %81 = vmatpush1.msra.mxu0 0.0
    %82 = vmatprep.subr.mxu0 0.0
    %83 = vmatpush1.msra.mxu0 0.0
    %84 = vmatprep.subr.mxu0 0.0
    %85 = vmatpush1.msra.mxu0 0.0
    %86 = vmatprep.subr.mxu0 0.0
    %87 = vmatpush1.msra.mxu0 0.0
    %88 = vmatprep.subr.mxu0 0.0
    %89 = vmatpush1.msra.mxu0 0.0
    %90 = vmatprep.subr.mxu0 0.0
    %91 = vmatpush1.msra.mxu0 0.0
    %92 = vmatprep.subr.mxu0 0.0
    %93 = vmatpush1.msra.mxu0 0.0
    %94 = vmatprep.subr.mxu0 0.0
    %95 = vmatpush1.msra.mxu0 0.0
    %96 = vmatprep.subr.mxu0 0.0
    %97 = vmatpush1.msra.mxu0 0.0
    %98 = vmatprep.subr.mxu0 0.0
    %99 = vmatpush1.msra.mxu0 0.0
    %100 = vmatprep.subr.mxu0 0.0
    %101 = vmatpush1.msra.mxu0 0.0
    %102 = vmatprep.subr.mxu0 0.0
    %103 = vmatpush1.msra.mxu0 0.0
    %104 = vmatprep.subr.mxu0 0.0
    %105 = vmatpush1.msra.mxu0 0.0
    %106 = vmatprep.subr.mxu0 0.0
    %107 = vmatpush1.msra.mxu0 0.0
    %108 = vmatprep.subr.mxu0 0.0
    %109 = vmatpush1.msra.mxu0 0.0
    %110 = vmatprep.subr.mxu0 0.0
    %111 = vmatpush1.msra.mxu0 0.0
    %112 = vmatprep.mubr.f32.mxu0 0.0
    %113 = vmatmul.mubr.f32.gmra.mrb[0].mxu0 %v46
    %v114 = vpop.f32.mrb[0].mxu0
    %v115 = vadd.f32 %v42, %v114
    %v116 = vpop.f32.mrb[0].mxu0
    %117 = vdwg.mxu0
    %v118 = vmax.f32 %v115, 0.0
    %v119 = vld [vmem:[#allocation2 + $0x8] sm:$0xff]
    %v120 = vld [vmem:[#allocation2 + $0x28] sm:$0xff]
    %v121 = vld [vmem:[#allocation2 + $0x48] sm:$0xff]
    %v122 = vld [vmem:[#allocation2 + $0x68] sm:$0xff]
    %v123 = vld [vmem:[%s3 + $0x1] sm:$0x1]
    %v125 = vlaneseq
    %v126 = vshrl.u32 %v125, 7
    %v127 = vsub.s32 0, %v126
    %v128 = vrot.slane %v123, %v127
    %v131 = vsel %vm44, %v118, 0
    %133 = vmatprep.subr.mxu0 0.0
    %134 = vmatpush1.msra.mxu0 %v119
    %135 = vmatprep.subr.mxu0 0.0
    %136 = vmatpush1.msra.mxu0 %v120
    %137 = vmatprep.subr.mxu0 0.0
    %138 = vmatpush1.msra.mxu0 %v121
    %139 = vmatprep.subr.mxu0 0.0
    %140 = vmatpush1.msra.mxu0 %v122
    %141 = vmatprep.subr.mxu0 0.0
    %142 = vmatpush1.msra.mxu0 0.0
    %143 = vmatprep.subr.mxu0 0.0
    %144 = vmatpush1.msra.mxu0 0.0
    %145 = vmatprep.subr.mxu0 0.0
    %146 = vmatpush1.msra.mxu0 0.0
    %147 = vmatprep.subr.mxu0 0.0
    %148 = vmatpush1.msra.mxu0 0.0
    %149 = vmatprep.subr.mxu0 0.0
    %150 = vmatpush1.msra.mxu0 0.0
    %151 = vmatprep.subr.mxu0 0.0
    %152 = vmatpush1.msra.mxu0 0.0
    %153 = vmatprep.subr.mxu0 0.0
    %154 = vmatpush1.msra.mxu0 0.0
    %155 = vmatprep.subr.mxu0 0.0
    %156 = vmatpush1.msra.mxu0 0.0
    %157 = vmatprep.subr.mxu0 0.0
    %158 = vmatpush1.msra.mxu0 0.0
    %159 = vmatprep.subr.mxu0 0.0
    %160 = vmatpush1.msra.mxu0 0.0
    %161 = vmatprep.subr.mxu0 0.0
    %162 = vmatpush1.msra.mxu0 0.0
    %163 = vmatprep.subr.mxu0 0.0
    %164 = vmatpush1.msra.mxu0 0.0
    %165 = vmatprep.subr.mxu0 0.0
    %166 = vmatpush1.msra.mxu0 0.0
    %167 = vmatprep.subr.mxu0 0.0
    %168 = vmatpush1.msra.mxu0 0.0
    %169 = vmatprep.subr.mxu0 0.0
    %170 = vmatpush1.msra.mxu0 0.0
    %171 = vmatprep.subr.mxu0 0.0
    %172 = vmatpush1.msra.mxu0 0.0
    %173 = vmatprep.subr.mxu0 0.0
    %174 = vmatpush1.msra.mxu0 0.0
    %175 = vmatprep.subr.mxu0 0.0
    %176 = vmatpush1.msra.mxu0 0.0
    %177 = vmatprep.subr.mxu0 0.0
    %178 = vmatpush1.msra.mxu0 0.0
    %179 = vmatprep.subr.mxu0 0.0
    %180 = vmatpush1.msra.mxu0 0.0
    %181 = vmatprep.subr.mxu0 0.0
    %182 = vmatpush1.msra.mxu0 0.0
    %183 = vmatprep.subr.mxu0 0.0
    %184 = vmatpush1.msra.mxu0 0.0
    %185 = vmatprep.subr.mxu0 0.0
    %186 = vmatpush1.msra.mxu0 0.0
    %187 = vmatprep.subr.mxu0 0.0
    %188 = vmatpush1.msra.mxu0 0.0
    %189 = vmatprep.subr.mxu0 0.0
    %190 = vmatpush1.msra.mxu0 0.0
    %191 = vmatprep.subr.mxu0 0.0
    %192 = vmatpush1.msra.mxu0 0.0
    %193 = vmatprep.subr.mxu0 0.0
    %194 = vmatpush1.msra.mxu0 0.0
    %195 = vmatprep.subr.mxu0 0.0
    %196 = vmatpush1.msra.mxu0 0.0
    %197 = vmatprep.mubr.f32.mxu0 0.0
    %198 = vmatmul.mubr.f32.gmra.mrb[0].mxu0 %v131
    %v199 = vpop.f32.mrb[0].mxu0
    %v200 = vadd.f32 %v128, %v199
    %v201 = vpop.f32.mrb[0].mxu0
    %202 = vdwg.mxu0
    %v203 = vmax.f32 %v200, 0.0
    %v204 = vld [vmem:[#allocation2 + $0x10] sm:$0xff]
    %v205 = vld [vmem:[#allocation2 + $0x18] sm:$0xff]
    %v206 = vld [vmem:[#allocation2 + $0x30] sm:$0xff]
    %v207 = vld [vmem:[#allocation2 + $0x38] sm:$0xff]
    %v208 = vld [vmem:[#allocation2 + $0x50] sm:$0xff]
    %v209 = vld [vmem:[#allocation2 + $0x58] sm:$0xff]
    %v210 = vld [vmem:[#allocation2 + $0x70] sm:$0xff]
    %v211 = vld [vmem:[#allocation2 + $0x78] sm:$0xff]
    %v212 = vld [vmem:[%s3 + $0x2] sm:$0x3]
    %v214 = vlaneseq
    %v215 = vshrl.u32 %v214, 7
    %v216 = vsub.s32 0, %v215
    %v217 = vrot.slane %v212, %v216
    %v218 = vlaneseq
    %v219 = vshrl.u32 %v218, 7
    %v220 = vsub.s32 1, %v219
    %v221 = vrot.slane %v212, %v220
    %v225 = vsel %vm44, %v203, 0
    %227 = vmatprep.subr.mxu0 %v205
    %228 = vmatpush1.msra.mxu0 %v204
    %229 = vmatprep.subr.mxu0 %v207
    %230 = vmatpush1.msra.mxu0 %v206
    %231 = vmatprep.subr.mxu0 %v209
    %232 = vmatpush1.msra.mxu0 %v208
    %233 = vmatprep.subr.mxu0 %v211
    %234 = vmatpush1.msra.mxu0 %v210
    %235 = vmatprep.subr.mxu0 0.0
    %236 = vmatpush1.msra.mxu0 0.0
    %237 = vmatprep.subr.mxu0 0.0
    %238 = vmatpush1.msra.mxu0 0.0
    %239 = vmatprep.subr.mxu0 0.0
    %240 = vmatpush1.msra.mxu0 0.0
    %241 = vmatprep.subr.mxu0 0.0
    %242 = vmatpush1.msra.mxu0 0.0
    %243 = vmatprep.subr.mxu0 0.0
    %244 = vmatpush1.msra.mxu0 0.0
    %245 = vmatprep.subr.mxu0 0.0
    %246 = vmatpush1.msra.mxu0 0.0
    %247 = vmatprep.subr.mxu0 0.0
    %248 = vmatpush1.msra.mxu0 0.0
    %249 = vmatprep.subr.mxu0 0.0
    %250 = vmatpush1.msra.mxu0 0.0
    %251 = vmatprep.subr.mxu0 0.0
    %252 = vmatpush1.msra.mxu0 0.0
    %253 = vmatprep.subr.mxu0 0.0
    %254 = vmatpush1.msra.mxu0 0.0
    %255 = vmatprep.subr.mxu0 0.0
    %256 = vmatpush1.msra.mxu0 0.0
    %257 = vmatprep.subr.mxu0 0.0
    %258 = vmatpush1.msra.mxu0 0.0
    %259 = vmatprep.subr.mxu0 0.0
    %260 = vmatpush1.msra.mxu0 0.0
    %261 = vmatprep.subr.mxu0 0.0
    %262 = vmatpush1.msra.mxu0 0.0
    %263 = vmatprep.subr.mxu0 0.0
    %264 = vmatpush1.msra.mxu0 0.0
    %265 = vmatprep.subr.mxu0 0.0
    %266 = vmatpush1.msra.mxu0 0.0
    %267 = vmatprep.subr.mxu0 0.0
    %268 = vmatpush1.msra.mxu0 0.0
    %269 = vmatprep.subr.mxu0 0.0
    %270 = vmatpush1.msra.mxu0 0.0
    %271 = vmatprep.subr.mxu0 0.0
    %272 = vmatpush1.msra.mxu0 0.0
    %273 = vmatprep.subr.mxu0 0.0
    %274 = vmatpush1.msra.mxu0 0.0
    %275 = vmatprep.subr.mxu0 0.0
    %276 = vmatpush1.msra.mxu0 0.0
    %277 = vmatprep.subr.mxu0 0.0
    %278 = vmatpush1.msra.mxu0 0.0
    %279 = vmatprep.subr.mxu0 0.0
    %280 = vmatpush1.msra.mxu0 0.0
    %281 = vmatprep.subr.mxu0 0.0
    %282 = vmatpush1.msra.mxu0 0.0
    %283 = vmatprep.subr.mxu0 0.0
    %284 = vmatpush1.msra.mxu0 0.0
    %285 = vmatprep.subr.mxu0 0.0
    %286 = vmatpush1.msra.mxu0 0.0
    %287 = vmatprep.subr.mxu0 0.0
    %288 = vmatpush1.msra.mxu0 0.0
    %289 = vmatprep.subr.mxu0 0.0
    %290 = vmatpush1.msra.mxu0 0.0
    %291 = vmatprep.mubr.f32.mxu0 0.0
    %292 = vmatmul.mubr.f32.gmra.mrb[0].mxu0 %v225
    %v293 = vpop.f32.mrb[0].mxu0
    %v294 = vadd.f32 %v217, %v293
    %v295 = vpop.f32.mrb[0].mxu0
    %v296 = vadd.f32 %v221, %v295
    %297 = vdwg.mxu0
    %v298 = vtanh.pop %v296
    %v299 = vadd.f32 %v298, 1.0
    %v300 = vmul.f32 %v299, 6.0
    %v301 = vadd.f32 %v300, -10.0
    %v302 = vmul.f32 %v301, 1.442695
    %v303 = vpow.pop %v302
    %v304 = vmul.f32 %v32, %v303
    %v305 = vadd.f32 %v294, %v304
    %v306 = vlaneseq
    %v307 = vand.u32 %v306, 127
    %vm308 = vcmp.lt.s32.totalorder %v307, 4
    %v309 = vmul.f32 %v32, -0.5
    %v310 = vmul.f32 %v309, %v32
    %v311 = vsub.f32 %v310, %v301
    %v312 = vsel %vm308, %v311, 0.0
    %313 = vadd.xlane.f32.xlu0 %v312
    %v314 = vpop.xlane.xlu0 %313
    %v315 = vsub.f32 %v314, 3.675754
    %v316 = vtanh.pop %v294
    %v317 = vtanh.pop %v305
    %v318 = vmul.f32 %v317, %v317
    %v319 = vsub.f32 1.0, %v318
    %v320 = vmax.f32 %v319, 0.0
    %v321 = vadd.f32 %v320, 1e-06
    %v322 = vlog2.pop %v321
    %v323 = vmul.f32 %v322, 0.6931472
    %v324 = vsel %vm308, %v323, 0.0
    %325 = vadd.xlane.f32.xlu0 %v324
    %v326 = vpop.xlane.xlu0 %325
    %v327 = vsub.f32 %v315, %v326
    %328 = vst [vmem:[%s4] sm:$0xff] %v316
    %329 = vst [vmem:[%s4 + $0x8] sm:$0xff] %v317
    %v330 = vsel %vm308, %v301, %v327
    %331 = vst [vmem:[%s4 + $0x10] sm:$0xff] %v330
    // Predicated region
    $region22: #{actor_forward.1} parent=1 // pred_check
      _
    $region23: #{actor_forward.1} parent=1 // pred_check_branch
      %333 = sbr.rel (0) target = $region25
    $region24: #{actor_forward.1} parent=1 // pred_region
      _
    $region25: #{actor_forward.1} parent=1 // pred_fallthru
      _
    // Predicated region
    $region26: #{actor_forward.1} parent=1 // pred_check
      _
    $region27: #{actor_forward.1} parent=1 // pred_check_branch
      %335 = sbr.rel (0) target = $region29
    $region28: #{actor_forward.1} parent=1 // pred_region
      _
    $region29: #{actor_forward.1} parent=1 // pred_fallthru
      _
    %336 = vsyncpa [#allocation3], 1

</llo_original>
